<compile_context>
chip_gen: v5e
topology: v5e:2x2
jax: 0.10.0
libtpu: 0.0.40
codegen_flags: <defaults>
</compile_context>

<pallas_src>
import functools

import jax
import jax.numpy as jnp
from jax import lax
from jax.experimental import pallas as pl
from jax.experimental.pallas import tpu as pltpu


def _mmd_kernel(x_ref, y_ref, out_ref, *, n_x, n_y, n_kernels, mul_factor,
                fixed_bandwidth, gram_in_bf16):
    x = x_ref[...].astype(jnp.float32)                       # (Nx, D)
    y = y_ref[...].astype(jnp.float32)                       # (Ny, D)
    n = n_x + n_y

    # Row squared norms (always f32, even if the Gram matmul runs in bf16).
    sq_x = jnp.sum(x * x, axis=-1, keepdims=True)            # (Nx, 1)
    sq_y = jnp.sum(y * y, axis=-1, keepdims=True)            # (Ny, 1)

    # RBF.get_bandwidth: sum of the FULL L2 matrix / (n^2 - n), computed
    # analytically in O(N*D):  sum_ij ||zi-zj||^2 = 2N*sum||zi||^2 - 2||sum zi||^2.
    # Exact in f32, independent of the (possibly bf16) Gram blocks, and it
    # removes the data dependence that would force all three L2 blocks to be
    # live in VMEM at once.
    if fixed_bandwidth is None:
        s_norm = jnp.sum(sq_x) + jnp.sum(sq_y)
        col_sum = (jnp.sum(x, axis=0, keepdims=True)
                   + jnp.sum(y, axis=0, keepdims=True))       # (1, D)
        l2_total = 2.0 * float(n) * s_norm - 2.0 * jnp.sum(col_sum * col_sum)
        bandwidth = l2_total / float(n * n - n)
    else:
        bandwidth = jnp.float32(fixed_bandwidth)
    # Exact scalar reciprocal, hoisted once.  (pl.reciprocal(approx=True) is
    # "free" on the EUP but its ~1e-3 error gets amplified by the final
    # XX - 2*XY + YY cancellation.)
    inv_bw = 1.0 / bandwidth

    c = n_kernels // 2
    dn = (((1,), (1,)), ((), ()))                             # contract last axes

    def multi_kernel_sum(l2):
        """sum over elements of sum_k exp(-l2 / (bandwidth * mul_factor**(k - c)))."""
        if float(mul_factor) == 2.0:
            # Base the single exp on the SMALLEST coefficient (largest
            # multiplier); every other term is the square of the previous one,
            # i.e. a VPU mul.  1 EUP op per element, no sqrt, no underflow of
            # the wide-bandwidth terms.
            inv_m_max = 1.0 / (2.0 ** (n_kernels - 1 - c))
            term = jnp.exp(-(l2 * (inv_bw * inv_m_max)))      # one EUP exp / elem
            acc = jnp.sum(term)
            for _ in range(n_kernels - 1):
                term = term * term                            # VPU
                acc = acc + jnp.sum(term)                     # XLU reduce (idle slot)
            return acc
        # Generic ladder: hoisted scalar coefficient, no per-element division.
        acc = jnp.zeros((), jnp.float32)
        for k in range(n_kernels):
            coef = -(float(mul_factor) ** (c - k)) * inv_bw   # = -1 / (bw * m_k)
            acc = acc + jnp.sum(jnp.exp(l2 * coef))
        return acc

    def block_sum(a, sq_a, b, sq_b):
        """sum over elements of the multi-kernel RBF block K(a, b)."""
        ga = a.astype(jnp.bfloat16) if gram_in_bf16 else a
        gb = b.astype(jnp.bfloat16) if gram_in_bf16 else b
        gram = lax.dot_general(ga, gb, dn, preferred_element_type=jnp.float32)
        l2 = jnp.maximum(sq_a + sq_b.T - 2.0 * gram, 0.0)     # cdist(a,b)**2
        return multi_kernel_sum(l2)

    # Strictly sequential blocks: only one block's Gram/L2/ladder temporaries
    # are live at a time (the YX block equals XY by symmetry and is skipped).
    s_xx = block_sum(x, sq_x, x, sq_x)
    s_xy = block_sum(x, sq_x, y, sq_y)
    s_yy = block_sum(y, sq_y, y, sq_y)

    # XX.mean() - 2 * XY.mean() + YY.mean()
    out_ref[0] = (s_xx / float(n_x * n_x)
                  - 2.0 * s_xy / float(n_x * n_y)
                  + s_yy / float(n_y * n_y))


def _vmem_limit_bytes(n_x, n_y, d, x_dtype, y_dtype):
    """Scoped-VMEM budget sized from the problem, capped under v7x's 64 MiB."""
    in_bytes = (n_x * d * jnp.dtype(x_dtype).itemsize
                + n_y * d * jnp.dtype(y_dtype).itemsize)
    big = max(n_x, n_y)
    # f32 copies of inputs + row norms + ~3 live N^2-class buffers for the
    # largest block (gram, l2, ladder term) -- blocks are processed sequentially.
    live_f32 = 4 * ((n_x + n_y) * d + (n_x + n_y) + 3 * big * big)
    est = int(1.5 * (in_bytes + live_f32)) + (4 << 20)
    return max(min(est, 56 << 20), 16 << 20)


def mmd_loss(x, y, *, n_kernels=5, mul_factor=2.0, bandwidth=None,
             use_bf16_gram=False):
    """JAX/Pallas equivalent of MMDLoss(kernel=RBF(n_kernels, mul_factor, bandwidth))."""
    n_x, d = x.shape
    n_y, d_y = y.shape
    assert d == d_y

    kernel = functools.partial(
        _mmd_kernel,
        n_x=n_x,
        n_y=n_y,
        n_kernels=int(n_kernels),
        mul_factor=float(mul_factor),
        fixed_bandwidth=bandwidth,
        gram_in_bf16=bool(use_bf16_gram),
    )

    out = pl.pallas_call(
        kernel,
        out_shape=jax.ShapeDtypeStruct((1,), jnp.float32),
        in_specs=[pl.BlockSpec(memory_space=pltpu.MemorySpace.VMEM),
                  pl.BlockSpec(memory_space=pltpu.MemorySpace.VMEM)],
        out_specs=pl.BlockSpec(memory_space=pltpu.MemorySpace.SMEM),
        compiler_params=pltpu.CompilerParams(
            vmem_limit_bytes=_vmem_limit_bytes(n_x, n_y, d, x.dtype, y.dtype)),
    )(x, y)   # caller dtype passed through; promoted to f32 inside the kernel
    return out[0]


def _mmd_ref(x, y, n_kernels=5, mul_factor=2.0, bandwidth=None):
    """Pure-JAX reference mirroring the PyTorch module (for verification)."""
    z = jnp.concatenate([x, y], axis=0).astype(jnp.float32)
    d2 = jnp.sum((z[:, None, :] - z[None, :, :]) ** 2, axis=-1)
    n = z.shape[0]
    if bandwidth is None:
        bw = jnp.sum(d2) / (n * n - n)
    else:
        bw = jnp.float32(bandwidth)
    mults = mul_factor ** (jnp.arange(n_kernels, dtype=jnp.float32) - n_kernels // 2)
    k = jnp.exp(-d2[None, ...] / (bw * mults)[:, None, None]).sum(0)
    nx = x.shape[0]
    return k[:nx, :nx].mean() - 2.0 * k[:nx, nx:].mean() + k[nx:, nx:].mean()


if __name__ == "__main__":
    key = jax.random.PRNGKey(0)
    kx, ky = jax.random.split(key)
    # Small shapes consistent with the module: 8 vs 16 samples, 32 features.
    x = jax.random.normal(kx, (8, 32), dtype=jnp.float32)
    y = jax.random.normal(ky, (16, 32), dtype=jnp.float32) + 0.5

    # Default RBF(): data-dependent (analytic) bandwidth, mul_factor=2 ladder.
    loss = mmd_loss(x, y)
    jax.block_until_ready(loss)
    ref = _mmd_ref(x, y)
    assert jnp.allclose(loss, ref, rtol=2e-4, atol=2e-5), (loss, ref)

    # Fixed-bandwidth path.
    loss_fb = mmd_loss(x, y, bandwidth=32.0)
    jax.block_until_ready(loss_fb)
    ref_fb = _mmd_ref(x, y, bandwidth=32.0)
    assert jnp.allclose(loss_fb, ref_fb, rtol=2e-4, atol=2e-5), (loss_fb, ref_fb)

    # Non power-of-two multiplier ladder exercises the generic exp fallback.
    loss_g = mmd_loss(x, y, n_kernels=3, mul_factor=3.0)
    jax.block_until_ready(loss_g)
    ref_g = _mmd_ref(x, y, n_kernels=3, mul_factor=3.0)
    assert jnp.allclose(loss_g, ref_g, rtol=2e-4, atol=2e-5), (loss_g, ref_g)

    # bf16 callers: inputs are no longer force-cast in the wrapper.
    xb, yb = x.astype(jnp.bfloat16), y.astype(jnp.bfloat16)
    loss_bf = mmd_loss(xb, yb)
    jax.block_until_ready(loss_bf)
    ref_bf = _mmd_ref(xb.astype(jnp.float32), yb.astype(jnp.float32))
    assert jnp.allclose(loss_bf, ref_bf, rtol=5e-3, atol=1e-3), (loss_bf, ref_bf)

    print("KERNEL_OK")
</pallas_src>

<mosaic_0001>
module attributes {stable_mosaic.version = 11 : i64} {
  func.func @_mmd_kernel(%arg0: memref<8x32xf32, #tpu.memory_space<vmem>>, %arg1: memref<16x32xf32, #tpu.memory_space<vmem>>, %arg2: memref<1xf32, #tpu.memory_space<smem>>) attributes {dimension_semantics = [], scalar_prefetch = 0 : i64, scratch_operands = 0 : i64, tpu.core_type = #tpu.core_type<tc>} {
    %c0 = arith.constant 0 : index
    %c0_0 = arith.constant 0 : index
    %0 = vector.load %arg0[%c0, %c0_0] : memref<8x32xf32, #tpu.memory_space<vmem>>, vector<8x32xf32>
    %c0_1 = arith.constant 0 : index
    %c0_2 = arith.constant 0 : index
    %1 = vector.load %arg1[%c0_1, %c0_2] : memref<16x32xf32, #tpu.memory_space<vmem>>, vector<16x32xf32>
    %2 = arith.mulf %0, %0 : vector<8x32xf32>
    %cst = arith.constant dense<0.000000e+00> : vector<8xf32>
    %3 = vector.multi_reduction <add>, %2, %cst [1] : vector<8x32xf32> to vector<8xf32>
    %4 = vector.shape_cast %3 : vector<8xf32> to vector<8x1xf32>
    %5 = arith.mulf %1, %1 : vector<16x32xf32>
    %cst_3 = arith.constant dense<0.000000e+00> : vector<16xf32>
    %6 = vector.multi_reduction <add>, %5, %cst_3 [1] : vector<16x32xf32> to vector<16xf32>
    %7 = vector.shape_cast %6 : vector<16xf32> to vector<16x1xf32>
    %8 = vector.shape_cast %4 : vector<8x1xf32> to vector<1x8x1xf32>
    %cst_4 = arith.constant dense<0.000000e+00> : vector<1xf32>
    %9 = vector.multi_reduction <add>, %8, %cst_4 [1, 2] : vector<1x8x1xf32> to vector<1xf32>
    %10 = vector.shape_cast %9 : vector<1xf32> to vector<1x1x1xf32>
    %11 = vector.extract %10[0, 0, 0] : f32 from vector<1x1x1xf32>
    %12 = vector.shape_cast %7 : vector<16x1xf32> to vector<1x16x1xf32>
    %cst_5 = arith.constant dense<0.000000e+00> : vector<1xf32>
    %13 = vector.multi_reduction <add>, %12, %cst_5 [1, 2] : vector<1x16x1xf32> to vector<1xf32>
    %14 = vector.shape_cast %13 : vector<1xf32> to vector<1x1x1xf32>
    %15 = vector.extract %14[0, 0, 0] : f32 from vector<1x1x1xf32>
    %16 = arith.addf %11, %15 : f32
    %cst_6 = arith.constant dense<0.000000e+00> : vector<32xf32>
    %17 = vector.multi_reduction <add>, %0, %cst_6 [0] : vector<8x32xf32> to vector<32xf32>
    %18 = vector.shape_cast %17 : vector<32xf32> to vector<1x32xf32>
    %cst_7 = arith.constant dense<0.000000e+00> : vector<32xf32>
    %19 = vector.multi_reduction <add>, %1, %cst_7 [0] : vector<16x32xf32> to vector<32xf32>
    %20 = vector.shape_cast %19 : vector<32xf32> to vector<1x32xf32>
    %21 = arith.addf %18, %20 : vector<1x32xf32>
    %cst_8 = arith.constant 4.800000e+01 : f32
    %22 = arith.mulf %cst_8, %16 : f32
    %23 = arith.mulf %21, %21 : vector<1x32xf32>
    %24 = vector.shape_cast %23 : vector<1x32xf32> to vector<1x1x32xf32>
    %cst_9 = arith.constant dense<0.000000e+00> : vector<1xf32>
    %25 = vector.multi_reduction <add>, %24, %cst_9 [1, 2] : vector<1x1x32xf32> to vector<1xf32>
    %26 = vector.shape_cast %25 : vector<1xf32> to vector<1x1x1xf32>
    %27 = vector.extract %26[0, 0, 0] : f32 from vector<1x1x1xf32>
    %cst_10 = arith.constant 2.000000e+00 : f32
    %28 = arith.mulf %cst_10, %27 : f32
    %29 = arith.subf %22, %28 : f32
    %cst_11 = arith.constant 5.520000e+02 : f32
    %30 = arith.divf %29, %cst_11 : f32
    %cst_12 = arith.constant 1.000000e+00 : f32
    %31 = arith.divf %cst_12, %30 : f32
    %cst_13 = arith.constant dense<0.000000e+00> : vector<8x8xf32>
    %32 = tpu.matmul %0, %0, %cst_13 {dimension_numbers = #tpu.dot_dimension_numbers<[1], [1], [0], [0], [0, 0, 1, 0], [], []>} : vector<8x32xf32>, vector<8x32xf32>, vector<8x8xf32> -> vector<8x8xf32>
    %33 = tpu.transpose %4, [1, 0] : vector<8x1xf32> -> vector<1x8xf32>
    %34 = vector.broadcast %4 : vector<8x1xf32> to vector<8x8xf32>
    %35 = vector.broadcast %33 : vector<1x8xf32> to vector<8x8xf32>
    %36 = arith.addf %34, %35 : vector<8x8xf32>
    %cst_14 = arith.constant 2.000000e+00 : f32
    %37 = vector.broadcast %cst_14 : f32 to vector<8x8xf32>
    %38 = arith.mulf %37, %32 : vector<8x8xf32>
    %39 = arith.subf %36, %38 : vector<8x8xf32>
    %cst_15 = arith.constant 0.000000e+00 : f32
    %40 = vector.broadcast %cst_15 : f32 to vector<8x8xf32>
    %41 = arith.maximumf %39, %40 : vector<8x8xf32>
    %cst_16 = arith.constant 2.500000e-01 : f32
    %42 = arith.mulf %31, %cst_16 : f32
    %43 = vector.broadcast %42 : f32 to vector<8x8xf32>
    %44 = arith.mulf %41, %43 : vector<8x8xf32>
    %cst_17 = arith.constant 0.000000e+00 : f32
    %45 = vector.broadcast %cst_17 : f32 to vector<8x8xf32>
    %46 = arith.subf %45, %44 : vector<8x8xf32>
    %47 = math.exp %46 : vector<8x8xf32>
    %48 = vector.shape_cast %47 : vector<8x8xf32> to vector<1x8x8xf32>
    %cst_18 = arith.constant dense<0.000000e+00> : vector<1xf32>
    %49 = vector.multi_reduction <add>, %48, %cst_18 [1, 2] : vector<1x8x8xf32> to vector<1xf32>
    %50 = vector.shape_cast %49 : vector<1xf32> to vector<1x1x1xf32>
    %51 = vector.extract %50[0, 0, 0] : f32 from vector<1x1x1xf32>
    %52 = arith.mulf %47, %47 : vector<8x8xf32>
    %53 = vector.shape_cast %52 : vector<8x8xf32> to vector<1x8x8xf32>
    %cst_19 = arith.constant dense<0.000000e+00> : vector<1xf32>
    %54 = vector.multi_reduction <add>, %53, %cst_19 [1, 2] : vector<1x8x8xf32> to vector<1xf32>
    %55 = vector.shape_cast %54 : vector<1xf32> to vector<1x1x1xf32>
    %56 = vector.extract %55[0, 0, 0] : f32 from vector<1x1x1xf32>
    %57 = arith.addf %51, %56 : f32
    %58 = arith.mulf %52, %52 : vector<8x8xf32>
    %59 = vector.shape_cast %58 : vector<8x8xf32> to vector<1x8x8xf32>
    %cst_20 = arith.constant dense<0.000000e+00> : vector<1xf32>
    %60 = vector.multi_reduction <add>, %59, %cst_20 [1, 2] : vector<1x8x8xf32> to vector<1xf32>
    %61 = vector.shape_cast %60 : vector<1xf32> to vector<1x1x1xf32>
    %62 = vector.extract %61[0, 0, 0] : f32 from vector<1x1x1xf32>
    %63 = arith.addf %57, %62 : f32
    %64 = arith.mulf %58, %58 : vector<8x8xf32>
    %65 = vector.shape_cast %64 : vector<8x8xf32> to vector<1x8x8xf32>
    %cst_21 = arith.constant dense<0.000000e+00> : vector<1xf32>
    %66 = vector.multi_reduction <add>, %65, %cst_21 [1, 2] : vector<1x8x8xf32> to vector<1xf32>
    %67 = vector.shape_cast %66 : vector<1xf32> to vector<1x1x1xf32>
    %68 = vector.extract %67[0, 0, 0] : f32 from vector<1x1x1xf32>
    %69 = arith.addf %63, %68 : f32
    %70 = arith.mulf %64, %64 : vector<8x8xf32>
    %71 = vector.shape_cast %70 : vector<8x8xf32> to vector<1x8x8xf32>
    %cst_22 = arith.constant dense<0.000000e+00> : vector<1xf32>
    %72 = vector.multi_reduction <add>, %71, %cst_22 [1, 2] : vector<1x8x8xf32> to vector<1xf32>
    %73 = vector.shape_cast %72 : vector<1xf32> to vector<1x1x1xf32>
    %74 = vector.extract %73[0, 0, 0] : f32 from vector<1x1x1xf32>
    %75 = arith.addf %69, %74 : f32
    %cst_23 = arith.constant dense<0.000000e+00> : vector<8x16xf32>
    %76 = tpu.matmul %0, %1, %cst_23 {dimension_numbers = #tpu.dot_dimension_numbers<[1], [1], [0], [0], [0, 0, 1, 0], [], []>} : vector<8x32xf32>, vector<16x32xf32>, vector<8x16xf32> -> vector<8x16xf32>
    %77 = tpu.transpose %7, [1, 0] : vector<16x1xf32> -> vector<1x16xf32>
    %78 = vector.broadcast %4 : vector<8x1xf32> to vector<8x16xf32>
    %79 = vector.broadcast %77 : vector<1x16xf32> to vector<8x16xf32>
    %80 = arith.addf %78, %79 : vector<8x16xf32>
    %cst_24 = arith.constant 2.000000e+00 : f32
    %81 = vector.broadcast %cst_24 : f32 to vector<8x16xf32>
    %82 = arith.mulf %81, %76 : vector<8x16xf32>
    %83 = arith.subf %80, %82 : vector<8x16xf32>
    %cst_25 = arith.constant 0.000000e+00 : f32
    %84 = vector.broadcast %cst_25 : f32 to vector<8x16xf32>
    %85 = arith.maximumf %83, %84 : vector<8x16xf32>
    %cst_26 = arith.constant 2.500000e-01 : f32
    %86 = arith.mulf %31, %cst_26 : f32
    %87 = vector.broadcast %86 : f32 to vector<8x16xf32>
    %88 = arith.mulf %85, %87 : vector<8x16xf32>
    %cst_27 = arith.constant 0.000000e+00 : f32
    %89 = vector.broadcast %cst_27 : f32 to vector<8x16xf32>
    %90 = arith.subf %89, %88 : vector<8x16xf32>
    %91 = math.exp %90 : vector<8x16xf32>
    %92 = vector.shape_cast %91 : vector<8x16xf32> to vector<1x8x16xf32>
    %cst_28 = arith.constant dense<0.000000e+00> : vector<1xf32>
    %93 = vector.multi_reduction <add>, %92, %cst_28 [1, 2] : vector<1x8x16xf32> to vector<1xf32>
    %94 = vector.shape_cast %93 : vector<1xf32> to vector<1x1x1xf32>
    %95 = vector.extract %94[0, 0, 0] : f32 from vector<1x1x1xf32>
    %96 = arith.mulf %91, %91 : vector<8x16xf32>
    %97 = vector.shape_cast %96 : vector<8x16xf32> to vector<1x8x16xf32>
    %cst_29 = arith.constant dense<0.000000e+00> : vector<1xf32>
    %98 = vector.multi_reduction <add>, %97, %cst_29 [1, 2] : vector<1x8x16xf32> to vector<1xf32>
    %99 = vector.shape_cast %98 : vector<1xf32> to vector<1x1x1xf32>
    %100 = vector.extract %99[0, 0, 0] : f32 from vector<1x1x1xf32>
    %101 = arith.addf %95, %100 : f32
    %102 = arith.mulf %96, %96 : vector<8x16xf32>
    %103 = vector.shape_cast %102 : vector<8x16xf32> to vector<1x8x16xf32>
    %cst_30 = arith.constant dense<0.000000e+00> : vector<1xf32>
    %104 = vector.multi_reduction <add>, %103, %cst_30 [1, 2] : vector<1x8x16xf32> to vector<1xf32>
    %105 = vector.shape_cast %104 : vector<1xf32> to vector<1x1x1xf32>
    %106 = vector.extract %105[0, 0, 0] : f32 from vector<1x1x1xf32>
    %107 = arith.addf %101, %106 : f32
    %108 = arith.mulf %102, %102 : vector<8x16xf32>
    %109 = vector.shape_cast %108 : vector<8x16xf32> to vector<1x8x16xf32>
    %cst_31 = arith.constant dense<0.000000e+00> : vector<1xf32>
    %110 = vector.multi_reduction <add>, %109, %cst_31 [1, 2] : vector<1x8x16xf32> to vector<1xf32>
    %111 = vector.shape_cast %110 : vector<1xf32> to vector<1x1x1xf32>
    %112 = vector.extract %111[0, 0, 0] : f32 from vector<1x1x1xf32>
    %113 = arith.addf %107, %112 : f32
    %114 = arith.mulf %108, %108 : vector<8x16xf32>
    %115 = vector.shape_cast %114 : vector<8x16xf32> to vector<1x8x16xf32>
    %cst_32 = arith.constant dense<0.000000e+00> : vector<1xf32>
    %116 = vector.multi_reduction <add>, %115, %cst_32 [1, 2] : vector<1x8x16xf32> to vector<1xf32>
    %117 = vector.shape_cast %116 : vector<1xf32> to vector<1x1x1xf32>
    %118 = vector.extract %117[0, 0, 0] : f32 from vector<1x1x1xf32>
    %119 = arith.addf %113, %118 : f32
    %cst_33 = arith.constant dense<0.000000e+00> : vector<16x16xf32>
    %120 = tpu.matmul %1, %1, %cst_33 {dimension_numbers = #tpu.dot_dimension_numbers<[1], [1], [0], [0], [0, 0, 1, 0], [], []>} : vector<16x32xf32>, vector<16x32xf32>, vector<16x16xf32> -> vector<16x16xf32>
    %121 = tpu.transpose %7, [1, 0] : vector<16x1xf32> -> vector<1x16xf32>
    %122 = vector.broadcast %7 : vector<16x1xf32> to vector<16x16xf32>
    %123 = vector.broadcast %121 : vector<1x16xf32> to vector<16x16xf32>
    %124 = arith.addf %122, %123 : vector<16x16xf32>
    %cst_34 = arith.constant 2.000000e+00 : f32
    %125 = vector.broadcast %cst_34 : f32 to vector<16x16xf32>
    %126 = arith.mulf %125, %120 : vector<16x16xf32>
    %127 = arith.subf %124, %126 : vector<16x16xf32>
    %cst_35 = arith.constant 0.000000e+00 : f32
    %128 = vector.broadcast %cst_35 : f32 to vector<16x16xf32>
    %129 = arith.maximumf %127, %128 : vector<16x16xf32>
    %cst_36 = arith.constant 2.500000e-01 : f32
    %130 = arith.mulf %31, %cst_36 : f32
    %131 = vector.broadcast %130 : f32 to vector<16x16xf32>
    %132 = arith.mulf %129, %131 : vector<16x16xf32>
    %cst_37 = arith.constant 0.000000e+00 : f32
    %133 = vector.broadcast %cst_37 : f32 to vector<16x16xf32>
    %134 = arith.subf %133, %132 : vector<16x16xf32>
    %135 = math.exp %134 : vector<16x16xf32>
    %136 = vector.shape_cast %135 : vector<16x16xf32> to vector<1x16x16xf32>
    %cst_38 = arith.constant dense<0.000000e+00> : vector<1xf32>
    %137 = vector.multi_reduction <add>, %136, %cst_38 [1, 2] : vector<1x16x16xf32> to vector<1xf32>
    %138 = vector.shape_cast %137 : vector<1xf32> to vector<1x1x1xf32>
    %139 = vector.extract %138[0, 0, 0] : f32 from vector<1x1x1xf32>
    %140 = arith.mulf %135, %135 : vector<16x16xf32>
    %141 = vector.shape_cast %140 : vector<16x16xf32> to vector<1x16x16xf32>
    %cst_39 = arith.constant dense<0.000000e+00> : vector<1xf32>
    %142 = vector.multi_reduction <add>, %141, %cst_39 [1, 2] : vector<1x16x16xf32> to vector<1xf32>
    %143 = vector.shape_cast %142 : vector<1xf32> to vector<1x1x1xf32>
    %144 = vector.extract %143[0, 0, 0] : f32 from vector<1x1x1xf32>
    %145 = arith.addf %139, %144 : f32
    %146 = arith.mulf %140, %140 : vector<16x16xf32>
    %147 = vector.shape_cast %146 : vector<16x16xf32> to vector<1x16x16xf32>
    %cst_40 = arith.constant dense<0.000000e+00> : vector<1xf32>
    %148 = vector.multi_reduction <add>, %147, %cst_40 [1, 2] : vector<1x16x16xf32> to vector<1xf32>
    %149 = vector.shape_cast %148 : vector<1xf32> to vector<1x1x1xf32>
    %150 = vector.extract %149[0, 0, 0] : f32 from vector<1x1x1xf32>
    %151 = arith.addf %145, %150 : f32
    %152 = arith.mulf %146, %146 : vector<16x16xf32>
    %153 = vector.shape_cast %152 : vector<16x16xf32> to vector<1x16x16xf32>
    %cst_41 = arith.constant dense<0.000000e+00> : vector<1xf32>
    %154 = vector.multi_reduction <add>, %153, %cst_41 [1, 2] : vector<1x16x16xf32> to vector<1xf32>
    %155 = vector.shape_cast %154 : vector<1xf32> to vector<1x1x1xf32>
    %156 = vector.extract %155[0, 0, 0] : f32 from vector<1x1x1xf32>
    %157 = arith.addf %151, %156 : f32
    %158 = arith.mulf %152, %152 : vector<16x16xf32>
    %159 = vector.shape_cast %158 : vector<16x16xf32> to vector<1x16x16xf32>
    %cst_42 = arith.constant dense<0.000000e+00> : vector<1xf32>
    %160 = vector.multi_reduction <add>, %159, %cst_42 [1, 2] : vector<1x16x16xf32> to vector<1xf32>
    %161 = vector.shape_cast %160 : vector<1xf32> to vector<1x1x1xf32>
    %162 = vector.extract %161[0, 0, 0] : f32 from vector<1x1x1xf32>
    %163 = arith.addf %157, %162 : f32
    %cst_43 = arith.constant 6.400000e+01 : f32
    %164 = arith.divf %75, %cst_43 : f32
    %cst_44 = arith.constant 2.000000e+00 : f32
    %165 = arith.mulf %cst_44, %119 : f32
    %cst_45 = arith.constant 1.280000e+02 : f32
    %166 = arith.divf %165, %cst_45 : f32
    %167 = arith.subf %164, %166 : f32
    %cst_46 = arith.constant 2.560000e+02 : f32
    %168 = arith.divf %163, %cst_46 : f32
    %169 = arith.addf %167, %168 : f32
    %c0_47 = arith.constant 0 : index
    %170 = memref.load %arg2[%c0_47] : memref<1xf32, #tpu.memory_space<smem>>
    memref.store %169, %arg2[%c0_47] : memref<1xf32, #tpu.memory_space<smem>>
    return
  }
}

</mosaic_0001>

<llo_original>
// kernel: tpu_custom_call.1
$region0: #{tpu_custom_call.1}
  #allocation0 [shape = 'u32[]', space=smem, size = 0x4, offset = 0x4, fixed_abs, tag = 'smem constant byte address 0x4 - core index']
  #allocation1 [shape = 'u32[72,128]{1,0:T(1,128)}', space=vmem, size = 0x9000, scoped, tag = 'internal scratch']
  %s0 = inlined_call_operand.hbm [shape: f32[8,32], index: 0, kind: input, shape index: {}]
  %s1 = inlined_call_operand.hbm [shape: f32[16,32], index: 1, kind: input, shape index: {}]
  %s2 = inlined_call_operand.hbm [shape: f32[1], index: 2, kind: output, shape index: {}]
  %s3 = sld [smem:[#allocation0]]
  $region26: #{tpu_custom_call.1} parent=0
    _
  %s5 = ssub.s32 1, %s3
  %s6 = scalar_select 0, %s5, %s3
  $region1: #{tpu_custom_call.1} parent=0
    #allocation2 [shape = 'u8[4096]{0}', space=vmem, size = 0x1000, scoped, tag = 'input window, operand 0, single buffered']
    #allocation3 [shape = 's32[1]{0}', space=sflag, size = 0x4, scoped, tag = 'scoped memory for tpu_custom_call.1']
    #allocation4 [shape = 's32[1]{0}', space=sflag, size = 0x4, scoped, tag = 'scoped memory for tpu_custom_call.1']
    #allocation5 [shape = 'u8[8192]{0}', space=vmem, size = 0x2000, scoped, tag = 'input window, operand 1, single buffered']
    #allocation6 [shape = 's32[1]{0}', space=sflag, size = 0x4, scoped, tag = 'scoped memory for tpu_custom_call.1']
    #allocation7 [shape = 'u8[512]{0}', space=smem, size = 0x200, scoped, tag = 'output window, operand 0, single buffered']
    %7 = vsyncpa [#allocation3], 0
    %8 = vsyncpa [#allocation6], 0
    %9 = vsyncpa [#allocation4], 0
    // Predicated region
    $region2: #{tpu_custom_call.1} parent=1 // pred_check
      _
    $region3: #{tpu_custom_call.1} parent=1 // pred_check_branch
      %11 = sbr.rel (0) target = $region5
    $region4: #{tpu_custom_call.1} parent=1 // pred_region
      %13 = vsyncadd [#allocation3], 0
      %s15 = sshll.u32 %s0, 4
      %s16 = int_to_ptr.hbm [resolvable:$true] %s15
      %s17 = sshll.u32 [#allocation2], 4
      %s18 = int_to_ptr.vmem [resolvable:$true] %s17
      %20 = dma.hbm_to_vmem [thread:$0]  %s16, 128, %s18, [#allocation3]
    $region5: #{tpu_custom_call.1} parent=1 // pred_fallthru
      _
    // Predicated region
    $region6: #{tpu_custom_call.1} parent=1 // pred_check
      _
    $region7: #{tpu_custom_call.1} parent=1 // pred_check_branch
      %22 = sbr.rel (0) target = $region9
    $region8: #{tpu_custom_call.1} parent=1 // pred_region
      %24 = vsyncadd [#allocation6], 0
      %s25 = sshll.u32 %s1, 4
      %s26 = int_to_ptr.hbm [resolvable:$true] %s25
      %s27 = sshll.u32 [#allocation5], 4
      %s28 = int_to_ptr.vmem [resolvable:$true] %s27
      %33 = dma.hbm_to_vmem [thread:$0]  %s26, 256, %s28, [#allocation6], 128, 128, 8
    $region9: #{tpu_custom_call.1} parent=1 // pred_fallthru
      _
    // Predicated region
    $region10: #{tpu_custom_call.1} parent=1 // pred_check
      _
    $region11: #{tpu_custom_call.1} parent=1 // pred_check_branch
      %35 = sbr.rel (0) target = $region13
    $region12: #{tpu_custom_call.1} parent=1 // pred_region
      %37 = dma.done [#allocation3], 128
    $region13: #{tpu_custom_call.1} parent=1 // pred_fallthru
      _
    // Predicated region
    $region14: #{tpu_custom_call.1} parent=1 // pred_check
      _
    $region15: #{tpu_custom_call.1} parent=1 // pred_check_branch
      %39 = sbr.rel (0) target = $region17
    $region16: #{tpu_custom_call.1} parent=1 // pred_region
      %41 = dma.done [#allocation6], 256
    $region17: #{tpu_custom_call.1} parent=1 // pred_fallthru
      _
    %v42 = vld [vmem:[#allocation2] sm:$0xff]
    %v43 = vld [vmem:[#allocation5] sm:$0xff]
    %v44 = vld [vmem:[#allocation5 + $0x8] sm:$0xff]
    %v45 = vmul.f32 %v42, %v42
    %vm46 = vcmask 261120
    %v47 = vsel %vm46, %v45, 0.0
    %48 = vadd.xlane.f32.xlu0 %v47
    %v49 = vpop.xlane.xlu0 %48
    %v50 = vmul.f32 %v43, %v43
    %v51 = vmul.f32 %v44, %v44
    %v52 = vsel %vm46, %v50, 0.0
    %53 = vadd.xlane.f32.xlu0 %v52
    %v54 = vpop.xlane.xlu0 %53
    %v55 = vsel %vm46, %v51, 0.0
    %56 = vadd.xlane.f32.xlu0 %v55
    %v57 = vpop.xlane.xlu0 %56
    %vm58 = vcmask 7168
    %v59 = vsel %vm58, %v49, 0.0
    %60 = vadd.xlane.f32.xlu0 %v59
    %v61 = vpop.xlane.xlu0 %60
    %v62 = vrot.slane %v61, 4
    %v63 = vadd.f32 %v61, %v62
    %v64 = vrot.slane %v63, 2
    %v65 = vadd.f32 %v63, %v64
    %v66 = vrot.slane %v65, 1
    %v67 = vadd.f32 %v65, %v66
    %s68 = vtos %v67
    %v69 = vsel %vm58, %v54, 0.0
    %v70 = vsel %vm58, %v57, 0.0
    %v71 = vadd.f32 %v69, %v70
    %72 = vadd.xlane.f32.xlu0 %v71
    %v73 = vpop.xlane.xlu0 %72
    %v74 = vrot.slane %v73, 4
    %v75 = vadd.f32 %v73, %v74
    %v76 = vrot.slane %v75, 2
    %v77 = vadd.f32 %v75, %v76
    %v78 = vrot.slane %v77, 1
    %v79 = vadd.f32 %v77, %v78
    %s80 = vtos %v79
    %s81 = sadd.f32 %s68, %s80
    %v82 = vsel %vm46, %v42, 0.0
    %v83 = vrot.slane %v82, 4
    %v84 = vadd.f32 %v82, %v83
    %v85 = vrot.slane %v84, 2
    %v86 = vadd.f32 %v84, %v85
    %v87 = vrot.slane %v86, 1
    %v88 = vadd.f32 %v86, %v87
    %v89 = vsel %vm46, %v43, 0.0
    %v90 = vsel %vm46, %v44, 0.0
    %v91 = vadd.f32 %v89, %v90
    %v92 = vrot.slane %v91, 4
    %v93 = vadd.f32 %v91, %v92
    %v94 = vrot.slane %v93, 2
    %v95 = vadd.f32 %v93, %v94
    %v96 = vrot.slane %v95, 1
    %v97 = vadd.f32 %v95, %v96
    %v98 = vadd.f32 %v88, %v97
    %s99 = smul.f32 %s81, 48.0
    %v100 = vmul.f32 %v98, %v98
    %vm101 = vcmask 253952
    %v102 = vsel %vm101, %v100, 0.0
    %103 = vadd.xlane.f32.xlu0 %v102
    %v104 = vpop.xlane.xlu0 %103
    %v105 = vrot.slane %v104, 4
    %v106 = vadd.f32 %v104, %v105
    %v107 = vrot.slane %v106, 2
    %v108 = vadd.f32 %v106, %v107
    %v109 = vrot.slane %v108, 1
    %v110 = vadd.f32 %v108, %v109
    %s111 = vtos %v110
    %s112 = smul.f32 %s111, 2.0
    %s113 = ssub.f32 %s99, %s112
    %v114 = vrcp.pop 552.0
    %v115 = vmul.f32 552.0, %v114
    %v116 = vsub.f32 1.0, %v115
    %v117 = vmul.f32 %v114, %v116
    %v118 = vadd.f32 %v114, %v117
    %vm119 = vweird.f32 %v114
    %v120 = vsel %vm119, %v114, %v118
    %s121 = vtos %v120
    %s122 = smul.f32 %s113, %s121
    %v123 = vstv %s122
    %v124 = vrcp.pop %v123
    %v125 = vmul.f32 %v123, %v124
    %v126 = vsub.f32 1.0, %v125
    %v127 = vmul.f32 %v124, %v126
    %v128 = vadd.f32 %v124, %v127
    %vm129 = vweird.f32 %v123
    %vm130 = vweird.f32 %v124
    %vm131 = vmor %vm129, %vm130
    %v132 = vsel %vm131, %v124, %v128
    %v133 = vand.u32 2147483647, %v123
    %vm134 = vcmp.eq.f32.partialorder %v133, 8.507059e+37
    %v135 = vand.u32 %v123, 2147483648
    %v136 = vor.u32 1.1754944e-38, %v135
    %v137 = vsel %vm134, %v136, %v132
    %s138 = vtos %v137
    %v140 = vsel %vm46, %v42, 0
    %142 = vmatpush.xpose.msra.mxu0 0.0
    %143 = vmatpush.xpose.msra.mxu0 0.0
    %144 = vmatpush.xpose.msra.mxu0 0.0
    %145 = vmatpush.xpose.msra.mxu0 0.0
    %146 = vmatpush.xpose.msra.mxu0 0.0
    %147 = vmatpush.xpose.msra.mxu0 0.0
    %148 = vmatpush.xpose.msra.mxu0 0.0
    %149 = vmatpush.xpose.msra.mxu0 0.0
    %150 = vmatpush.xpose.msra.mxu0 0.0
    %151 = vmatpush.xpose.msra.mxu0 0.0
    %152 = vmatpush.xpose.msra.mxu0 0.0
    %153 = vmatpush.xpose.msra.mxu0 0.0
    %154 = vmatpush.xpose.msra.mxu0 0.0
    %155 = vmatpush.xpose.msra.mxu0 0.0
    %156 = vmatpush.xpose.msra.mxu0 0.0
    %157 = vmatpush.xpose.msra.mxu0 %v140
    %158 = vmatmul.f32.gmra.mxu0 %v140
    %v159 = vpop.f32.mrf.mxu0
    %v160 = vadd.f32 0.0, %v159
    %161 = vdwg.mxu0
    %162 = vxpose.xlu0.b32.start [1/16] %v49, 128
    %163 = vxpose.xlu0.b32.cont [2/16] 0.0, 128
    %164 = vxpose.xlu0.b32.cont [3/16] 0.0, 128
    %165 = vxpose.xlu0.b32.cont [4/16] 0.0, 128
    %166 = vxpose.xlu0.b32.cont [5/16] 0.0, 128
    %167 = vxpose.xlu0.b32.cont [6/16] 0.0, 128
    %168 = vxpose.xlu0.b32.cont [7/16] 0.0, 128
    %169 = vxpose.xlu0.b32.cont [8/16] 0.0, 128
    %170 = vxpose.xlu0.b32.cont [9/16] 0.0, 128
    %171 = vxpose.xlu0.b32.cont [10/16] 0.0, 128
    %172 = vxpose.xlu0.b32.cont [11/16] 0.0, 128
    %173 = vxpose.xlu0.b32.cont [12/16] 0.0, 128
    %174 = vxpose.xlu0.b32.cont [13/16] 0.0, 128
    %175 = vxpose.xlu0.b32.cont [14/16] 0.0, 128
    %176 = vxpose.xlu0.b32.cont [15/16] 0.0, 128
    %177 = vxpose.xlu0.b32.end [16/16] 0.0, 128
    %v178 = vpop.trf.xlu0
    %v179 = vpop.trf.xlu0
    %v180 = vpop.trf.xlu0
    %v181 = vpop.trf.xlu0
    %v182 = vpop.trf.xlu0
    %v183 = vpop.trf.xlu0
    %v184 = vpop.trf.xlu0
    %v185 = vpop.trf.xlu0
    %v186 = vpop.trf.xlu0
    %v187 = vpop.trf.xlu0
    %v188 = vpop.trf.xlu0
    %v189 = vpop.trf.xlu0
    %v190 = vpop.trf.xlu0
    %v191 = vpop.trf.xlu0
    %v192 = vpop.trf.xlu0
    %v193 = vpop.trf.xlu0
    %v194 = vperm.slane %v178, 0
    %v195 = vadd.f32 %v49, %v194
    %v196 = vmul.f32 %v160, 2.0
    %v197 = vsub.f32 %v195, %v196
    %v198 = vmax.f32 %v197, 0.0
    %s199 = smul.f32 %s138, 0.25
    %v200 = vstv %s199
    %v201 = vmul.f32 %v198, %v200
    %v202 = vsub.f32 0.0, %v201
    %v203 = vmul.f32 %v202, 1.442695
    %v204 = vpow.pop %v203
    %vm205 = vcmask 64512
    %v206 = vsel %vm205, %v204, 0.0
    %207 = vadd.xlane.f32.xlu0 %v206
    %v208 = vpop.xlane.xlu0 %207
    %v209 = vrot.slane %v208, 4
    %v210 = vadd.f32 %v208, %v209
    %v211 = vrot.slane %v210, 2
    %v212 = vadd.f32 %v210, %v211
    %v213 = vrot.slane %v212, 1
    %v214 = vadd.f32 %v212, %v213
    %s215 = vtos %v214
    %v216 = vmul.f32 %v204, %v204
    %v217 = vsel %vm205, %v216, 0.0
    %218 = vadd.xlane.f32.xlu0 %v217
    %v219 = vpop.xlane.xlu0 %218
    %v220 = vrot.slane %v219, 4
    %v221 = vadd.f32 %v219, %v220
    %v222 = vrot.slane %v221, 2
    %v223 = vadd.f32 %v221, %v222
    %v224 = vrot.slane %v223, 1
    %v225 = vadd.f32 %v223, %v224
    %s226 = vtos %v225
    %s227 = sadd.f32 %s215, %s226
    %v228 = vmul.f32 %v216, %v216
    %v229 = vsel %vm205, %v228, 0.0
    %230 = vadd.xlane.f32.xlu0 %v229
    %v231 = vpop.xlane.xlu0 %230
    %v232 = vrot.slane %v231, 4
    %v233 = vadd.f32 %v231, %v232
    %v234 = vrot.slane %v233, 2
    %v235 = vadd.f32 %v233, %v234
    %v236 = vrot.slane %v235, 1
    %v237 = vadd.f32 %v235, %v236
    %s238 = vtos %v237
    %s239 = sadd.f32 %s227, %s238
    %v240 = vmul.f32 %v228, %v228
    %v241 = vsel %vm205, %v240, 0.0
    %242 = vadd.xlane.f32.xlu0 %v241
    %v243 = vpop.xlane.xlu0 %242
    %v244 = vrot.slane %v243, 4
    %v245 = vadd.f32 %v243, %v244
    %v246 = vrot.slane %v245, 2
    %v247 = vadd.f32 %v245, %v246
    %v248 = vrot.slane %v247, 1
    %v249 = vadd.f32 %v247, %v248
    %s250 = vtos %v249
    %s251 = sadd.f32 %s239, %s250
    %v252 = vmul.f32 %v240, %v240
    %v253 = vsel %vm205, %v252, 0.0
    %254 = vadd.xlane.f32.xlu0 %v253
    %v255 = vpop.xlane.xlu0 %254
    %v256 = vrot.slane %v255, 4
    %v257 = vadd.f32 %v255, %v256
    %v258 = vrot.slane %v257, 2
    %v259 = vadd.f32 %v257, %v258
    %v260 = vrot.slane %v259, 1
    %v261 = vadd.f32 %v259, %v260
    %s262 = vtos %v261
    %s263 = sadd.f32 %s251, %s262
    %v265 = vsel %vm46, %v43, 0
    %v268 = vsel %vm46, %v44, 0
    %270 = vmatpush.xpose.msra.mxu0 0.0
    %271 = vmatpush.xpose.msra.mxu0 0.0
    %272 = vmatpush.xpose.msra.mxu0 0.0
    %273 = vmatpush.xpose.msra.mxu0 0.0
    %274 = vmatpush.xpose.msra.mxu0 0.0
    %275 = vmatpush.xpose.msra.mxu0 0.0
    %276 = vmatpush.xpose.msra.mxu0 0.0
    %277 = vmatpush.xpose.msra.mxu0 0.0
    %278 = vmatpush.xpose.msra.mxu0 0.0
    %279 = vmatpush.xpose.msra.mxu0 0.0
    %280 = vmatpush.xpose.msra.mxu0 0.0
    %281 = vmatpush.xpose.msra.mxu0 0.0
    %282 = vmatpush.xpose.msra.mxu0 0.0
    %283 = vmatpush.xpose.msra.mxu0 0.0
    %284 = vmatpush.xpose.msra.mxu0 %v268
    %285 = vmatpush.xpose.msra.mxu0 %v265
    %286 = vmatmul.f32.gmra.mxu0 %v140
    %v287 = vpop.f32.mrf.mxu0
    %v288 = vadd.f32 0.0, %v287
    %289 = vdwg.mxu0
    %290 = vxpose.xlu0.b32.start [1/16] %v54, 128
    %291 = vxpose.xlu0.b32.cont [2/16] %v57, 128
    %292 = vxpose.xlu0.b32.cont [3/16] 0.0, 128
    %293 = vxpose.xlu0.b32.cont [4/16] 0.0, 128
    %294 = vxpose.xlu0.b32.cont [5/16] 0.0, 128
    %295 = vxpose.xlu0.b32.cont [6/16] 0.0, 128
    %296 = vxpose.xlu0.b32.cont [7/16] 0.0, 128
    %297 = vxpose.xlu0.b32.cont [8/16] 0.0, 128
    %298 = vxpose.xlu0.b32.cont [9/16] 0.0, 128
    %299 = vxpose.xlu0.b32.cont [10/16] 0.0, 128
    %300 = vxpose.xlu0.b32.cont [11/16] 0.0, 128
    %301 = vxpose.xlu0.b32.cont [12/16] 0.0, 128
    %302 = vxpose.xlu0.b32.cont [13/16] 0.0, 128
    %303 = vxpose.xlu0.b32.cont [14/16] 0.0, 128
    %304 = vxpose.xlu0.b32.cont [15/16] 0.0, 128
    %305 = vxpose.xlu0.b32.end [16/16] 0.0, 128
    %v306 = vpop.trf.xlu0
    %v307 = vpop.trf.xlu0
    %v308 = vpop.trf.xlu0
    %v309 = vpop.trf.xlu0
    %v310 = vpop.trf.xlu0
    %v311 = vpop.trf.xlu0
    %v312 = vpop.trf.xlu0
    %v313 = vpop.trf.xlu0
    %v314 = vpop.trf.xlu0
    %v315 = vpop.trf.xlu0
    %v316 = vpop.trf.xlu0
    %v317 = vpop.trf.xlu0
    %v318 = vpop.trf.xlu0
    %v319 = vpop.trf.xlu0
    %v320 = vpop.trf.xlu0
    %v321 = vpop.trf.xlu0
    %v322 = vperm.slane %v306, 0
    %v323 = vadd.f32 %v49, %v322
    %v324 = vmul.f32 %v288, 2.0
    %v325 = vsub.f32 %v323, %v324
    %v326 = vmax.f32 %v325, 0.0
    %v327 = vmul.f32 %v326, %v200
    %v328 = vsub.f32 0.0, %v327
    %v329 = vmul.f32 %v328, 1.442695
    %v330 = vpow.pop %v329
    %vm331 = vcmask 130048
    %v332 = vsel %vm331, %v330, 0.0
    %333 = vadd.xlane.f32.xlu0 %v332
    %v334 = vpop.xlane.xlu0 %333
    %v335 = vrot.slane %v334, 4
    %v336 = vadd.f32 %v334, %v335
    %v337 = vrot.slane %v336, 2
    %v338 = vadd.f32 %v336, %v337
    %v339 = vrot.slane %v338, 1
    %v340 = vadd.f32 %v338, %v339
    %s341 = vtos %v340
    %v342 = vmul.f32 %v330, %v330
    %v343 = vsel %vm331, %v342, 0.0
    %344 = vadd.xlane.f32.xlu0 %v343
    %v345 = vpop.xlane.xlu0 %344
    %v346 = vrot.slane %v345, 4
    %v347 = vadd.f32 %v345, %v346
    %v348 = vrot.slane %v347, 2
    %v349 = vadd.f32 %v347, %v348
    %v350 = vrot.slane %v349, 1
    %v351 = vadd.f32 %v349, %v350
    %s352 = vtos %v351
    %s353 = sadd.f32 %s341, %s352
    %v354 = vmul.f32 %v342, %v342
    %v355 = vsel %vm331, %v354, 0.0
    %356 = vadd.xlane.f32.xlu0 %v355
    %v357 = vpop.xlane.xlu0 %356
    %v358 = vrot.slane %v357, 4
    %v359 = vadd.f32 %v357, %v358
    %v360 = vrot.slane %v359, 2
    %v361 = vadd.f32 %v359, %v360
    %v362 = vrot.slane %v361, 1
    %v363 = vadd.f32 %v361, %v362
    %s364 = vtos %v363
    %s365 = sadd.f32 %s353, %s364
    %v366 = vmul.f32 %v354, %v354
    %v367 = vsel %vm331, %v366, 0.0
    %368 = vadd.xlane.f32.xlu0 %v367
    %v369 = vpop.xlane.xlu0 %368
    %v370 = vrot.slane %v369, 4
    %v371 = vadd.f32 %v369, %v370
    %v372 = vrot.slane %v371, 2
    %v373 = vadd.f32 %v371, %v372
    %v374 = vrot.slane %v373, 1
    %v375 = vadd.f32 %v373, %v374
    %s376 = vtos %v375
    %s377 = sadd.f32 %s365, %s376
    %v378 = vmul.f32 %v366, %v366
    %v379 = vsel %vm331, %v378, 0.0
    %380 = vadd.xlane.f32.xlu0 %v379
    %v381 = vpop.xlane.xlu0 %380
    %v382 = vrot.slane %v381, 4
    %v383 = vadd.f32 %v381, %v382
    %v384 = vrot.slane %v383, 2
    %v385 = vadd.f32 %v383, %v384
    %v386 = vrot.slane %v385, 1
    %v387 = vadd.f32 %v385, %v386
    %s388 = vtos %v387
    %s389 = sadd.f32 %s377, %s388
    %390 = vmatpush.xpose.msra.mxu0 0.0
    %391 = vmatpush.xpose.msra.mxu0 0.0
    %392 = vmatpush.xpose.msra.mxu0 0.0
    %393 = vmatpush.xpose.msra.mxu0 0.0
    %394 = vmatpush.xpose.msra.mxu0 0.0
    %395 = vmatpush.xpose.msra.mxu0 0.0
    %396 = vmatpush.xpose.msra.mxu0 0.0
    %397 = vmatpush.xpose.msra.mxu0 0.0
    %398 = vmatpush.xpose.msra.mxu0 0.0
    %399 = vmatpush.xpose.msra.mxu0 0.0
    %400 = vmatpush.xpose.msra.mxu0 0.0
    %401 = vmatpush.xpose.msra.mxu0 0.0
    %402 = vmatpush.xpose.msra.mxu0 0.0
    %403 = vmatpush.xpose.msra.mxu0 0.0
    %404 = vmatpush.xpose.msra.mxu0 %v268
    %405 = vmatpush.xpose.msra.mxu0 %v265
    %406 = vmatmul.f32.gmra.mxu0 %v265
    %v407 = vpop.f32.mrf.mxu0
    %v408 = vadd.f32 0.0, %v407
    %409 = vmatmul.f32.gmra.mxu0 %v268
    %v410 = vpop.f32.mrf.mxu0
    %v411 = vadd.f32 0.0, %v410
    %412 = vdwg.mxu0
    %v413 = vadd.f32 %v54, %v322
    %v414 = vadd.f32 %v57, %v322
    %v415 = vmul.f32 %v408, 2.0
    %v416 = vmul.f32 %v411, 2.0
    %v417 = vsub.f32 %v413, %v415
    %v418 = vsub.f32 %v414, %v416
    %v419 = vmax.f32 %v417, 0.0
    %v420 = vmax.f32 %v418, 0.0
    %v421 = vmul.f32 %v419, %v200
    %v422 = vmul.f32 %v420, %v200
    %v423 = vsub.f32 0.0, %v421
    %v424 = vsub.f32 0.0, %v422
    %v425 = vmul.f32 %v423, 1.442695
    %v426 = vpow.pop %v425
    %v427 = vmul.f32 %v424, 1.442695
    %v428 = vpow.pop %v427
    %v429 = vsel %vm331, %v426, 0.0
    %v430 = vsel %vm331, %v428, 0.0
    %v431 = vadd.f32 %v429, %v430
    %432 = vadd.xlane.f32.xlu0 %v431
    %v433 = vpop.xlane.xlu0 %432
    %v434 = vrot.slane %v433, 4
    %v435 = vadd.f32 %v433, %v434
    %v436 = vrot.slane %v435, 2
    %v437 = vadd.f32 %v435, %v436
    %v438 = vrot.slane %v437, 1
    %v439 = vadd.f32 %v437, %v438
    %s440 = vtos %v439
    %v441 = vmul.f32 %v426, %v426
    %v442 = vmul.f32 %v428, %v428
    %v443 = vsel %vm331, %v441, 0.0
    %v444 = vsel %vm331, %v442, 0.0
    %v445 = vadd.f32 %v443, %v444
    %446 = vadd.xlane.f32.xlu0 %v445
    %v447 = vpop.xlane.xlu0 %446
    %v448 = vrot.slane %v447, 4
    %v449 = vadd.f32 %v447, %v448
    %v450 = vrot.slane %v449, 2
    %v451 = vadd.f32 %v449, %v450
    %v452 = vrot.slane %v451, 1
    %v453 = vadd.f32 %v451, %v452
    %s454 = vtos %v453
    %s455 = sadd.f32 %s440, %s454
    %v456 = vmul.f32 %v441, %v441
    %v457 = vmul.f32 %v442, %v442
    %v458 = vsel %vm331, %v456, 0.0
    %v459 = vsel %vm331, %v457, 0.0
    %v460 = vadd.f32 %v458, %v459
    %461 = vadd.xlane.f32.xlu0 %v460
    %v462 = vpop.xlane.xlu0 %461
    %v463 = vrot.slane %v462, 4
    %v464 = vadd.f32 %v462, %v463
    %v465 = vrot.slane %v464, 2
    %v466 = vadd.f32 %v464, %v465
    %v467 = vrot.slane %v466, 1
    %v468 = vadd.f32 %v466, %v467
    %s469 = vtos %v468
    %s470 = sadd.f32 %s455, %s469
    %v471 = vmul.f32 %v456, %v456
    %v472 = vmul.f32 %v457, %v457
    %v473 = vsel %vm331, %v471, 0.0
    %v474 = vsel %vm331, %v472, 0.0
    %v475 = vadd.f32 %v473, %v474
    %476 = vadd.xlane.f32.xlu0 %v475
    %v477 = vpop.xlane.xlu0 %476
    %v478 = vrot.slane %v477, 4
    %v479 = vadd.f32 %v477, %v478
    %v480 = vrot.slane %v479, 2
    %v481 = vadd.f32 %v479, %v480
    %v482 = vrot.slane %v481, 1
    %v483 = vadd.f32 %v481, %v482
    %s484 = vtos %v483
    %s485 = sadd.f32 %s470, %s484
    %v486 = vmul.f32 %v471, %v471
    %v487 = vmul.f32 %v472, %v472
    %v488 = vsel %vm331, %v486, 0.0
    %v489 = vsel %vm331, %v487, 0.0
    %v490 = vadd.f32 %v488, %v489
    %491 = vadd.xlane.f32.xlu0 %v490
    %v492 = vpop.xlane.xlu0 %491
    %v493 = vrot.slane %v492, 4
    %v494 = vadd.f32 %v492, %v493
    %v495 = vrot.slane %v494, 2
    %v496 = vadd.f32 %v494, %v495
    %v497 = vrot.slane %v496, 1
    %v498 = vadd.f32 %v496, %v497
    %s499 = vtos %v498
    %s500 = sadd.f32 %s485, %s499
    %v501 = vrcp.pop 64.0
    %v502 = vmul.f32 64.0, %v501
    %v503 = vsub.f32 1.0, %v502
    %v504 = vmul.f32 %v501, %v503
    %v505 = vadd.f32 %v501, %v504
    %vm506 = vweird.f32 %v501
    %v507 = vsel %vm506, %v501, %v505
    %s508 = vtos %v507
    %s509 = smul.f32 %s263, %s508
    %s510 = smul.f32 %s389, 2.0
    %v511 = vrcp.pop 128.0
    %v512 = vmul.f32 128.0, %v511
    %v513 = vsub.f32 1.0, %v512
    %v514 = vmul.f32 %v511, %v513
    %v515 = vadd.f32 %v511, %v514
    %vm516 = vweird.f32 %v511
    %v517 = vsel %vm516, %v511, %v515
    %s518 = vtos %v517
    %s519 = smul.f32 %s510, %s518
    %s520 = ssub.f32 %s509, %s519
    %v521 = vrcp.pop 256.0
    %v522 = vmul.f32 256.0, %v521
    %v523 = vsub.f32 1.0, %v522
    %v524 = vmul.f32 %v521, %v523
    %v525 = vadd.f32 %v521, %v524
    %vm526 = vweird.f32 %v521
    %v527 = vsel %vm526, %v521, %v525
    %s528 = vtos %v527
    %s529 = smul.f32 %s500, %s528
    %s530 = sadd.f32 %s520, %s529
    %s531 = scalar_lea.smem [#allocation7], 0
    %532 = sst [smem:[%s531]] %s530
    // Predicated region
    $region18: #{tpu_custom_call.1} parent=1 // pred_check
      _
    $region19: #{tpu_custom_call.1} parent=1 // pred_check_branch
      %534 = sbr.rel (0) target = $region21
    $region20: #{tpu_custom_call.1} parent=1 // pred_region
      %536 = vsyncadd [#allocation4], 0
      %s538 = sshll.u32 %s2, 4
      %s539 = int_to_ptr.hbm [resolvable:$true] %s538
      %541 = dma.smem_to_hbm [#allocation7], 16, %s539, [#allocation4]
    $region21: #{tpu_custom_call.1} parent=1 // pred_fallthru
      _
    // Predicated region
    $region22: #{tpu_custom_call.1} parent=1 // pred_check
      _
    $region23: #{tpu_custom_call.1} parent=1 // pred_check_branch
      %543 = sbr.rel (0) target = $region25
    $region24: #{tpu_custom_call.1} parent=1 // pred_region
      %545 = dma.done [#allocation4], 16
    $region25: #{tpu_custom_call.1} parent=1 // pred_fallthru
      _
    %546 = sfence
    %547 = vsyncpa [#allocation3], 1
    %548 = vsyncpa [#allocation6], 1
    %549 = vsyncpa [#allocation4], 1

</llo_original>
